<compile_context>
chip_gen: v6e
topology: v6e:2x2x1
jax: 0.10.0
libtpu: 0.0.40
codegen_flags: <defaults>
</compile_context>

<pallas_src>
import jax
import jax.numpy as jnp
from jax.experimental import pallas as pl
from jax.experimental.pallas import tpu as pltpu

IN_FEATURES = 768
NUM_CLASSES = 10
LANE = 128            # pad class dim to a full lane width
DEFAULT_TILE_B = 2048  # v7x-safe (fits 32 MiB scoped VMEM with 2x buffering)


def _round_up(x, m):
    return ((x + m - 1) // m) * m


def _linear_kernel(x_ref, wt_ref, b_ref, o_ref):
    # Hot path: one MXU matmul per batch tile + bias add, all in VMEM.
    acc = jnp.dot(x_ref[...], wt_ref[...], preferred_element_type=jnp.float32)
    o_ref[...] = (acc + b_ref[...]).astype(o_ref.dtype)


def _lenet_forward_padded(x, wt_pad, b_pad, *, tile_b=DEFAULT_TILE_B):
    """Linear layer on pre-transposed, lane-padded parameters.

    Args:
      x:      (B, 768) float32
      wt_pad: (768, Cp) float32, Cp a multiple of 128 (zero-padded columns)
      b_pad:  (1, Cp)   float32 (zero-padded)
    Returns:
      (B, Cp) float32  (caller slices off the padded classes)
    """
    B, K = x.shape
    Cp = wt_pad.shape[1]
    assert K == wt_pad.shape[0]
    assert Cp % LANE == 0

    # Tile the batch dim; keep tiles a multiple of 8 sublanes and pad B so the
    # grid covers it exactly (padding is tiny for small B, negligible at large B).
    tile_b = min(tile_b, _round_up(B, 8))
    Bp = _round_up(B, tile_b)
    if Bp != B:
        x = jnp.pad(x, ((0, Bp - B), (0, 0)))

    grid = (Bp // tile_b,)

    cost = pl.CostEstimate(
        flops=2 * Bp * K * Cp,
        transcendentals=0,
        bytes_accessed=Bp * K * 4 + K * Cp * 4 + Cp * 4 + Bp * Cp * 4,
    )

    out = pl.pallas_call(
        _linear_kernel,
        out_shape=jax.ShapeDtypeStruct((Bp, Cp), x.dtype),
        grid=grid,
        in_specs=[
            pl.BlockSpec((tile_b, K), lambda i: (i, 0)),   # x: streamed per tile
            pl.BlockSpec((K, Cp), lambda i: (0, 0)),       # weight: VMEM-resident
            pl.BlockSpec((1, Cp), lambda i: (0, 0)),       # bias:   VMEM-resident
        ],
        out_specs=pl.BlockSpec((tile_b, Cp), lambda i: (i, 0)),
        compiler_params=pltpu.CompilerParams(
            dimension_semantics=("parallel",),  # megacore-shardable on v7x
        ),
        cost_estimate=cost,
    )(x, wt_pad, b_pad)

    return out[:B]


def lenet_forward(x, weight, bias, *, tile_b=DEFAULT_TILE_B):
    """Convenience entry point taking PyTorch nn.Linear layout.

    Args:
      x:      (B, 768) float32
      weight: (C, 768) float32   (PyTorch layout)
      bias:   (C,)     float32
    Returns:
      (B, C) float32
    """
    C = weight.shape[0]
    Cp = _round_up(C, LANE)
    wt_pad = jnp.pad(weight.T, ((0, 0), (0, Cp - C)))      # (768, Cp)
    b_pad = jnp.pad(bias.reshape(1, C), ((0, 0), (0, Cp - C)))
    out = _lenet_forward_padded(x, wt_pad, b_pad, tile_b=tile_b)
    return out[:, :C]


class LeNetPallas:
    """Mirror of the PyTorch LeNet module (fc1 only).

    Parameters are stored pre-transposed and lane-padded so the per-call path
    is just the pallas_call + a cheap output slice.
    """

    def __init__(self, number_classes, dropout=False, key=None,
                 tile_b=DEFAULT_TILE_B):
        self.use_dropout = dropout
        # TODO(synk): training-mode dropout not implemented in-kernel (module
        # default is dropout=False; eval-mode dropout is identity anyway).
        self.num_classes = number_classes
        self.tile_b = tile_b
        if key is None:
            key = jax.random.PRNGKey(42)
        kw, kb = jax.random.split(key)
        # Deterministic init matching nn.Linear's U(-1/sqrt(fan_in), 1/sqrt(fan_in)).
        bound = 1.0 / jnp.sqrt(jnp.float32(IN_FEATURES))
        self.weight = jax.random.uniform(
            kw, (number_classes, IN_FEATURES), jnp.float32, -bound, bound)
        self.bias = jax.random.uniform(
            kb, (number_classes,), jnp.float32, -bound, bound)

        # Hoisted out of the hot path: transpose + zero-pad to a full 128-lane
        # output width (unmasked stores in-kernel; padded classes sliced off).
        Cp = _round_up(number_classes, LANE)
        self._cp = Cp
        self.wt_pad = jnp.pad(self.weight.T, ((0, 0), (0, Cp - number_classes)))
        self.b_pad = jnp.pad(self.bias.reshape(1, number_classes),
                             ((0, 0), (0, Cp - number_classes)))

    def __call__(self, x):
        out = _lenet_forward_padded(x, self.wt_pad, self.b_pad,
                                    tile_b=self.tile_b)
        return out[:, :self.num_classes]


if __name__ == "__main__":
    key = jax.random.PRNGKey(0)
    B = 8
    x = jax.random.normal(key, (B, IN_FEATURES), dtype=jnp.float32)

    model = LeNetPallas(number_classes=NUM_CLASSES, dropout=False)
    out = model(x)
    out = jax.block_until_ready(out)

    # Correctness check vs plain-JAX reference of the same math.
    ref = x @ model.weight.T + model.bias
    assert out.shape == (B, NUM_CLASSES)
    assert jnp.allclose(out, ref, atol=1e-5, rtol=1e-5)

    # Also exercise the convenience path (per-call padding).
    out2 = jax.block_until_ready(lenet_forward(x, model.weight, model.bias))
    assert jnp.allclose(out2, ref, atol=1e-5, rtol=1e-5)

    print("KERNEL_OK")
</pallas_src>

<mosaic_0001>
module attributes {stable_mosaic.version = 11 : i64} {
  func.func @_linear_kernel(%arg0: i32, %arg1: memref<8x768xf32, #tpu.memory_space<vmem>>, %arg2: memref<768x128xf32, #tpu.memory_space<vmem>>, %arg3: memref<1x128xf32, #tpu.memory_space<vmem>>, %arg4: memref<8x128xf32, #tpu.memory_space<vmem>>) attributes {dimension_semantics = [#tpu.dimension_semantics<parallel>], iteration_bounds = array<i64: 1>, scalar_prefetch = 0 : i64, scratch_operands = 0 : i64, tpu.core_type = #tpu.core_type<tc>, window_params = [{transform_indices = @transform_0, window_bounds = array<i64: 8, 768>}, {pipeline_mode = #tpu.pipeline_mode<synchronous>, transform_indices = @transform_1, window_bounds = array<i64: 768, 128>}, {pipeline_mode = #tpu.pipeline_mode<synchronous>, transform_indices = @transform_2, window_bounds = array<i64: 1, 128>}, {transform_indices = @transform_3, window_bounds = array<i64: 8, 128>}]} {
    %c0 = arith.constant 0 : index
    %c0_0 = arith.constant 0 : index
    %0 = vector.load %arg1[%c0, %c0_0] : memref<8x768xf32, #tpu.memory_space<vmem>>, vector<8x768xf32>
    %c0_1 = arith.constant 0 : index
    %c0_2 = arith.constant 0 : index
    %1 = vector.load %arg2[%c0_1, %c0_2] : memref<768x128xf32, #tpu.memory_space<vmem>>, vector<768x128xf32>
    %cst = arith.constant dense<0.000000e+00> : vector<8x128xf32>
    %2 = tpu.matmul %0, %1, %cst {dimension_numbers = #tpu.dot_dimension_numbers<[1], [0], [0], [1], [0, 0, 1, 1], [], []>} : vector<8x768xf32>, vector<768x128xf32>, vector<8x128xf32> -> vector<8x128xf32>
    %c0_3 = arith.constant 0 : index
    %c0_4 = arith.constant 0 : index
    %3 = vector.load %arg3[%c0_3, %c0_4] : memref<1x128xf32, #tpu.memory_space<vmem>>, vector<1x128xf32>
    %4 = vector.broadcast %3 : vector<1x128xf32> to vector<8x128xf32>
    %5 = arith.addf %2, %4 : vector<8x128xf32>
    %c0_5 = arith.constant 0 : index
    %c0_6 = arith.constant 0 : index
    %6 = vector.load %arg4[%c0_5, %c0_6] : memref<8x128xf32, #tpu.memory_space<vmem>>, vector<8x128xf32>
    tpu.vector_store %arg4[%c0_5, %c0_6], %5 {strides = array<i32>} : memref<8x128xf32, #tpu.memory_space<vmem>>, vector<8x128xf32>,
    return
  }
  func.func @transform_0(%arg0: i32) -> (i32, i32) {
    %c0_i32 = arith.constant 0 : i32
    %c0_i32_0 = arith.constant 0 : i32
    return %arg0, %c0_i32 : i32, i32
  }
  func.func @transform_1(%arg0: i32) -> (i32, i32) {
    %c0_i32 = arith.constant 0 : i32
    %c0_i32_0 = arith.constant 0 : i32
    %c0_i32_1 = arith.constant 0 : i32
    return %c0_i32, %c0_i32_0 : i32, i32
  }
  func.func @transform_2(%arg0: i32) -> (i32, i32) {
    %c0_i32 = arith.constant 0 : i32
    %c0_i32_0 = arith.constant 0 : i32
    %c0_i32_1 = arith.constant 0 : i32
    return %c0_i32, %c0_i32_0 : i32, i32
  }
  func.func @transform_3(%arg0: i32) -> (i32, i32) {
    %c0_i32 = arith.constant 0 : i32
    %c0_i32_0 = arith.constant 0 : i32
    return %arg0, %c0_i32 : i32, i32
  }
}

</mosaic_0001>

<llo_original>
// kernel: tpu_custom_call.1
$region0: #{tpu_custom_call.1}
  #allocation0 [shape = 'u32[]', space=smem, size = 0x4, offset = 0x4, fixed_abs, tag = 'smem constant byte address 0x4 - core index']
  #allocation1 [shape = 'u32[144,128]{1,0:T(1,128)}', space=vmem, size = 0x12000, scoped, tag = 'internal scratch']
  %s0 = inlined_call_operand.hbm [shape: f32[8,768], index: 0, kind: input, shape index: {}]
  %s1 = inlined_call_operand.hbm [shape: f32[768,128], index: 1, kind: input, shape index: {}]
  %s2 = inlined_call_operand.vmem [shape: f32[1,128], index: 2, kind: input, shape index: {}]
  %s3 = inlined_call_operand.hbm [shape: f32[8,128], index: 3, kind: output, shape index: {}]
  %s4 = sld [smem:[#allocation0]]
  $region30: #{tpu_custom_call.1} parent=0
    _
  %s6 = ssub.s32 1, %s4
  %s7 = scalar_select 0, %s6, %s4
  $region1: #{tpu_custom_call.1} parent=0
    #allocation2 [shape = 'u8[24576]{0}', space=vmem, size = 0x6000, scoped, tag = 'input window, operand 0, single buffered']
    #allocation3 [shape = 's32[1]{0}', space=sflag, size = 0x4, scoped, tag = 'scoped memory for tpu_custom_call.1']
    #allocation4 [shape = 's32[1]{0}', space=sflag, size = 0x4, scoped, tag = 'scoped memory for tpu_custom_call.1']
    #allocation5 [shape = 'u8[393216]{0}', space=vmem, size = 0x60000, scoped, tag = 'input window, operand 1, single buffered']
    #allocation6 [shape = 's32[1]{0}', space=sflag, size = 0x4, scoped, tag = 'scoped memory for tpu_custom_call.1']
    #allocation7 [shape = 'u8[4096]{0}', space=vmem, size = 0x1000, scoped, tag = 'output window, operand 0, single buffered']
    %8 = vsyncpa [#allocation3], 0
    %9 = vsyncpa [#allocation6], 0
    %10 = vsyncpa [#allocation4], 0
    // Predicated region
    $region2: #{tpu_custom_call.1} parent=1 // pred_check
      _
    $region3: #{tpu_custom_call.1} parent=1 // pred_check_branch
      %12 = sbr.rel (0) target = $region5
    $region4: #{tpu_custom_call.1} parent=1 // pred_region
      %s14 = ssub.s32 768, 768
      %15 = vsyncadd [#allocation3], %s14
      %s17 = sshll.u32 [#allocation2], 4
      %s18 = int_to_ptr.vmem [resolvable:$true] %s17
      %20 = dma.hbm_to_vmem [thread:$0]  %s0, 768, %s18, [#allocation3]
    $region5: #{tpu_custom_call.1} parent=1 // pred_fallthru
      _
    // Predicated region
    $region6: #{tpu_custom_call.1} parent=1 // pred_check
      _
    $region7: #{tpu_custom_call.1} parent=1 // pred_check_branch
      %22 = sbr.rel (0) target = $region9
    $region8: #{tpu_custom_call.1} parent=1 // pred_region
      %s24 = ssub.s32 12288, 12288
      %25 = vsyncadd [#allocation6], %s24
      %s26 = sshll.u32 [#allocation5], 4
      %s27 = int_to_ptr.vmem [resolvable:$true] %s26
      %32 = dma.hbm_to_vmem [thread:$0]  %s1, 12288, %s27, [#allocation6], 128, 128, 8
    $region9: #{tpu_custom_call.1} parent=1 // pred_fallthru
      _
    // Predicated region
    $region10: #{tpu_custom_call.1} parent=1 // pred_check
      _
    $region11: #{tpu_custom_call.1} parent=1 // pred_check_branch
      %34 = sbr.rel (0) target = $region13
    $region12: #{tpu_custom_call.1} parent=1 // pred_region
      _
    $region13: #{tpu_custom_call.1} parent=1 // pred_fallthru
      _
    // Predicated region
    $region14: #{tpu_custom_call.1} parent=1 // pred_check
      _
    $region15: #{tpu_custom_call.1} parent=1 // pred_check_branch
      %36 = sbr.rel (0) target = $region17
    $region16: #{tpu_custom_call.1} parent=1 // pred_region
      %37 = dma.done [#allocation3], 768
    $region17: #{tpu_custom_call.1} parent=1 // pred_fallthru
      _
    // Predicated region
    $region18: #{tpu_custom_call.1} parent=1 // pred_check
      _
    $region19: #{tpu_custom_call.1} parent=1 // pred_check_branch
      %39 = sbr.rel (0) target = $region21
    $region20: #{tpu_custom_call.1} parent=1 // pred_region
      %40 = dma.done [#allocation6], 12288
    $region21: #{tpu_custom_call.1} parent=1 // pred_fallthru
      _
    %v41 = vld [vmem:[#allocation2] sm:$0xff]
    %v42 = vld [vmem:[#allocation2 + $0x8] sm:$0xff]
    %v43 = vld [vmem:[#allocation2 + $0x10] sm:$0xff]
    %v44 = vld [vmem:[#allocation2 + $0x18] sm:$0xff]
    %v45 = vld [vmem:[#allocation2 + $0x20] sm:$0xff]
    %v46 = vld [vmem:[#allocation2 + $0x28] sm:$0xff]
    %v47 = vld [vmem:[#allocation5] sm:$0xff]
    %v48 = vld [vmem:[#allocation5 + $0x8] sm:$0xff]
    %v49 = vld [vmem:[#allocation5 + $0x10] sm:$0xff]
    %v50 = vld [vmem:[#allocation5 + $0x18] sm:$0xff]
    %v51 = vld [vmem:[#allocation5 + $0x20] sm:$0xff]
    %v52 = vld [vmem:[#allocation5 + $0x28] sm:$0xff]
    %v53 = vld [vmem:[#allocation5 + $0x30] sm:$0xff]
    %v54 = vld [vmem:[#allocation5 + $0x38] sm:$0xff]
    %v55 = vld [vmem:[#allocation5 + $0x40] sm:$0xff]
    %v56 = vld [vmem:[#allocation5 + $0x48] sm:$0xff]
    %v57 = vld [vmem:[#allocation5 + $0x50] sm:$0xff]
    %v58 = vld [vmem:[#allocation5 + $0x58] sm:$0xff]
    %v59 = vld [vmem:[#allocation5 + $0x60] sm:$0xff]
    %v60 = vld [vmem:[#allocation5 + $0x68] sm:$0xff]
    %v61 = vld [vmem:[#allocation5 + $0x70] sm:$0xff]
    %v62 = vld [vmem:[#allocation5 + $0x78] sm:$0xff]
    %v63 = vld [vmem:[#allocation5 + $0x80] sm:$0xff]
    %v64 = vld [vmem:[#allocation5 + $0x88] sm:$0xff]
    %v65 = vld [vmem:[#allocation5 + $0x90] sm:$0xff]
    %v66 = vld [vmem:[#allocation5 + $0x98] sm:$0xff]
    %v67 = vld [vmem:[#allocation5 + $0xa0] sm:$0xff]
    %v68 = vld [vmem:[#allocation5 + $0xa8] sm:$0xff]
    %v69 = vld [vmem:[#allocation5 + $0xb0] sm:$0xff]
    %v70 = vld [vmem:[#allocation5 + $0xb8] sm:$0xff]
    %v71 = vld [vmem:[#allocation5 + $0xc0] sm:$0xff]
    %v72 = vld [vmem:[#allocation5 + $0xc8] sm:$0xff]
    %v73 = vld [vmem:[#allocation5 + $0xd0] sm:$0xff]
    %v74 = vld [vmem:[#allocation5 + $0xd8] sm:$0xff]
    %v75 = vld [vmem:[#allocation5 + $0xe0] sm:$0xff]
    %v76 = vld [vmem:[#allocation5 + $0xe8] sm:$0xff]
    %v77 = vld [vmem:[#allocation5 + $0xf0] sm:$0xff]
    %v78 = vld [vmem:[#allocation5 + $0xf8] sm:$0xff]
    %v79 = vld [vmem:[#allocation5 + $0x100] sm:$0xff]
    %v80 = vld [vmem:[#allocation5 + $0x108] sm:$0xff]
    %v81 = vld [vmem:[#allocation5 + $0x110] sm:$0xff]
    %v82 = vld [vmem:[#allocation5 + $0x118] sm:$0xff]
    %v83 = vld [vmem:[#allocation5 + $0x120] sm:$0xff]
    %v84 = vld [vmem:[#allocation5 + $0x128] sm:$0xff]
    %v85 = vld [vmem:[#allocation5 + $0x130] sm:$0xff]
    %v86 = vld [vmem:[#allocation5 + $0x138] sm:$0xff]
    %v87 = vld [vmem:[#allocation5 + $0x140] sm:$0xff]
    %v88 = vld [vmem:[#allocation5 + $0x148] sm:$0xff]
    %v89 = vld [vmem:[#allocation5 + $0x150] sm:$0xff]
    %v90 = vld [vmem:[#allocation5 + $0x158] sm:$0xff]
    %v91 = vld [vmem:[#allocation5 + $0x160] sm:$0xff]
    %v92 = vld [vmem:[#allocation5 + $0x168] sm:$0xff]
    %v93 = vld [vmem:[#allocation5 + $0x170] sm:$0xff]
    %v94 = vld [vmem:[#allocation5 + $0x178] sm:$0xff]
    %v95 = vld [vmem:[#allocation5 + $0x180] sm:$0xff]
    %v96 = vld [vmem:[#allocation5 + $0x188] sm:$0xff]
    %v97 = vld [vmem:[#allocation5 + $0x190] sm:$0xff]
    %v98 = vld [vmem:[#allocation5 + $0x198] sm:$0xff]
    %v99 = vld [vmem:[#allocation5 + $0x1a0] sm:$0xff]
    %v100 = vld [vmem:[#allocation5 + $0x1a8] sm:$0xff]
    %v101 = vld [vmem:[#allocation5 + $0x1b0] sm:$0xff]
    %v102 = vld [vmem:[#allocation5 + $0x1b8] sm:$0xff]
    %v103 = vld [vmem:[#allocation5 + $0x1c0] sm:$0xff]
    %v104 = vld [vmem:[#allocation5 + $0x1c8] sm:$0xff]
    %v105 = vld [vmem:[#allocation5 + $0x1d0] sm:$0xff]
    %v106 = vld [vmem:[#allocation5 + $0x1d8] sm:$0xff]
    %v107 = vld [vmem:[#allocation5 + $0x1e0] sm:$0xff]
    %v108 = vld [vmem:[#allocation5 + $0x1e8] sm:$0xff]
    %v109 = vld [vmem:[#allocation5 + $0x1f0] sm:$0xff]
    %v110 = vld [vmem:[#allocation5 + $0x1f8] sm:$0xff]
    %v111 = vld [vmem:[#allocation5 + $0x200] sm:$0xff]
    %v112 = vld [vmem:[#allocation5 + $0x208] sm:$0xff]
    %v113 = vld [vmem:[#allocation5 + $0x210] sm:$0xff]
    %v114 = vld [vmem:[#allocation5 + $0x218] sm:$0xff]
    %v115 = vld [vmem:[#allocation5 + $0x220] sm:$0xff]
    %v116 = vld [vmem:[#allocation5 + $0x228] sm:$0xff]
    %v117 = vld [vmem:[#allocation5 + $0x230] sm:$0xff]
    %v118 = vld [vmem:[#allocation5 + $0x238] sm:$0xff]
    %v119 = vld [vmem:[#allocation5 + $0x240] sm:$0xff]
    %v120 = vld [vmem:[#allocation5 + $0x248] sm:$0xff]
    %v121 = vld [vmem:[#allocation5 + $0x250] sm:$0xff]
    %v122 = vld [vmem:[#allocation5 + $0x258] sm:$0xff]
    %v123 = vld [vmem:[#allocation5 + $0x260] sm:$0xff]
    %v124 = vld [vmem:[#allocation5 + $0x268] sm:$0xff]
    %v125 = vld [vmem:[#allocation5 + $0x270] sm:$0xff]
    %v126 = vld [vmem:[#allocation5 + $0x278] sm:$0xff]
    %v127 = vld [vmem:[#allocation5 + $0x280] sm:$0xff]
    %v128 = vld [vmem:[#allocation5 + $0x288] sm:$0xff]
    %v129 = vld [vmem:[#allocation5 + $0x290] sm:$0xff]
    %v130 = vld [vmem:[#allocation5 + $0x298] sm:$0xff]
    %v131 = vld [vmem:[#allocation5 + $0x2a0] sm:$0xff]
    %v132 = vld [vmem:[#allocation5 + $0x2a8] sm:$0xff]
    %v133 = vld [vmem:[#allocation5 + $0x2b0] sm:$0xff]
    %v134 = vld [vmem:[#allocation5 + $0x2b8] sm:$0xff]
    %v135 = vld [vmem:[#allocation5 + $0x2c0] sm:$0xff]
    %v136 = vld [vmem:[#allocation5 + $0x2c8] sm:$0xff]
    %v137 = vld [vmem:[#allocation5 + $0x2d0] sm:$0xff]
    %v138 = vld [vmem:[#allocation5 + $0x2d8] sm:$0xff]
    %v139 = vld [vmem:[#allocation5 + $0x2e0] sm:$0xff]
    %v140 = vld [vmem:[#allocation5 + $0x2e8] sm:$0xff]
    %v141 = vld [vmem:[#allocation5 + $0x2f0] sm:$0xff]
    %v142 = vld [vmem:[#allocation5 + $0x2f8] sm:$0xff]
    %v143 = vld [vmem:[%s2] sm:$0x1]
    %v145 = vlaneseq
    %v146 = vshrl.u32 %v145, 7
    %v147 = vsub.s32 0, %v146
    %v148 = vrot.slane %v143, %v147
    %150 = vmatprep.subr.mxu0 0.0
    %151 = vmatpush1.msra.mxu0 %v62
    %152 = vmatprep.subr.mxu0 0.0
    %153 = vmatpush1.msra.mxu0 %v61
    %154 = vmatprep.subr.mxu0 0.0
    %155 = vmatpush1.msra.mxu0 %v60
    %156 = vmatprep.subr.mxu0 0.0
    %157 = vmatpush1.msra.mxu0 %v59
    %158 = vmatprep.subr.mxu0 0.0
    %159 = vmatpush1.msra.mxu0 %v58
    %160 = vmatprep.subr.mxu0 0.0
    %161 = vmatpush1.msra.mxu0 %v57
    %162 = vmatprep.subr.mxu0 0.0
    %163 = vmatpush1.msra.mxu0 %v56
    %164 = vmatprep.subr.mxu0 0.0
    %165 = vmatpush1.msra.mxu0 %v55
    %166 = vmatprep.subr.mxu0 0.0
    %167 = vmatpush1.msra.mxu0 %v54
    %168 = vmatprep.subr.mxu0 0.0
    %169 = vmatpush1.msra.mxu0 %v53
    %170 = vmatprep.subr.mxu0 0.0
    %171 = vmatpush1.msra.mxu0 %v52
    %172 = vmatprep.subr.mxu0 0.0
    %173 = vmatpush1.msra.mxu0 %v51
    %174 = vmatprep.subr.mxu0 0.0
    %175 = vmatpush1.msra.mxu0 %v50
    %176 = vmatprep.subr.mxu0 0.0
    %177 = vmatpush1.msra.mxu0 %v49
    %178 = vmatprep.subr.mxu0 0.0
    %179 = vmatpush1.msra.mxu0 %v48
    %180 = vmatprep.subr.mxu0 0.0
    %181 = vmatpush1.msra.mxu0 %v47
    %182 = vmatprep.subr.mxu0 0.0
    %183 = vmatpush2.msra.mxu0 %v78
    %184 = vmatprep.subr.mxu0 0.0
    %185 = vmatpush2.msra.mxu0 %v77
    %186 = vmatprep.subr.mxu0 0.0
    %187 = vmatpush2.msra.mxu0 %v76
    %188 = vmatprep.subr.mxu0 0.0
    %189 = vmatpush2.msra.mxu0 %v75
    %190 = vmatprep.subr.mxu0 0.0
    %191 = vmatpush2.msra.mxu0 %v74
    %192 = vmatprep.subr.mxu0 0.0
    %193 = vmatpush2.msra.mxu0 %v73
    %194 = vmatprep.subr.mxu0 0.0
    %195 = vmatpush2.msra.mxu0 %v72
    %196 = vmatprep.subr.mxu0 0.0
    %197 = vmatpush2.msra.mxu0 %v71
    %198 = vmatprep.subr.mxu0 0.0
    %199 = vmatpush2.msra.mxu0 %v70
    %200 = vmatprep.subr.mxu0 0.0
    %201 = vmatpush2.msra.mxu0 %v69
    %202 = vmatprep.subr.mxu0 0.0
    %203 = vmatpush2.msra.mxu0 %v68
    %204 = vmatprep.subr.mxu0 0.0
    %205 = vmatpush2.msra.mxu0 %v67
    %206 = vmatprep.subr.mxu0 0.0
    %207 = vmatpush2.msra.mxu0 %v66
    %208 = vmatprep.subr.mxu0 0.0
    %209 = vmatpush2.msra.mxu0 %v65
    %210 = vmatprep.subr.mxu0 0.0
    %211 = vmatpush2.msra.mxu0 %v64
    %212 = vmatprep.subr.mxu0 0.0
    %213 = vmatpush2.msra.mxu0 %v63
    %214 = vmatprep.mubr.f32.mxu0 %v42
    %215 = vmatmul.mubr.f32.gmra.mxu0 %v41
    %v216 = vpop.f32.mrf.mxu0
    %v217 = vadd.f32 %v148, %v216
    %v218 = vpop.f32.mrf.mxu0
    %219 = vdwg.mxu0
    %220 = vmatprep.subr.mxu0 0.0
    %221 = vmatpush1.msra.mxu0 %v94
    %222 = vmatprep.subr.mxu0 0.0
    %223 = vmatpush1.msra.mxu0 %v93
    %224 = vmatprep.subr.mxu0 0.0
    %225 = vmatpush1.msra.mxu0 %v92
    %226 = vmatprep.subr.mxu0 0.0
    %227 = vmatpush1.msra.mxu0 %v91
    %228 = vmatprep.subr.mxu0 0.0
    %229 = vmatpush1.msra.mxu0 %v90
    %230 = vmatprep.subr.mxu0 0.0
    %231 = vmatpush1.msra.mxu0 %v89
    %232 = vmatprep.subr.mxu0 0.0
    %233 = vmatpush1.msra.mxu0 %v88
    %234 = vmatprep.subr.mxu0 0.0
    %235 = vmatpush1.msra.mxu0 %v87
    %236 = vmatprep.subr.mxu0 0.0
    %237 = vmatpush1.msra.mxu0 %v86
    %238 = vmatprep.subr.mxu0 0.0
    %239 = vmatpush1.msra.mxu0 %v85
    %240 = vmatprep.subr.mxu0 0.0
    %241 = vmatpush1.msra.mxu0 %v84
    %242 = vmatprep.subr.mxu0 0.0
    %243 = vmatpush1.msra.mxu0 %v83
    %244 = vmatprep.subr.mxu0 0.0
    %245 = vmatpush1.msra.mxu0 %v82
    %246 = vmatprep.subr.mxu0 0.0
    %247 = vmatpush1.msra.mxu0 %v81
    %248 = vmatprep.subr.mxu0 0.0
    %249 = vmatpush1.msra.mxu0 %v80
    %250 = vmatprep.subr.mxu0 0.0
    %251 = vmatpush1.msra.mxu0 %v79
    %252 = vmatprep.subr.mxu0 0.0
    %253 = vmatpush2.msra.mxu0 %v110
    %254 = vmatprep.subr.mxu0 0.0
    %255 = vmatpush2.msra.mxu0 %v109
    %256 = vmatprep.subr.mxu0 0.0
    %257 = vmatpush2.msra.mxu0 %v108
    %258 = vmatprep.subr.mxu0 0.0
    %259 = vmatpush2.msra.mxu0 %v107
    %260 = vmatprep.subr.mxu0 0.0
    %261 = vmatpush2.msra.mxu0 %v106
    %262 = vmatprep.subr.mxu0 0.0
    %263 = vmatpush2.msra.mxu0 %v105
    %264 = vmatprep.subr.mxu0 0.0
    %265 = vmatpush2.msra.mxu0 %v104
    %266 = vmatprep.subr.mxu0 0.0
    %267 = vmatpush2.msra.mxu0 %v103
    %268 = vmatprep.subr.mxu0 0.0
    %269 = vmatpush2.msra.mxu0 %v102
    %270 = vmatprep.subr.mxu0 0.0
    %271 = vmatpush2.msra.mxu0 %v101
    %272 = vmatprep.subr.mxu0 0.0
    %273 = vmatpush2.msra.mxu0 %v100
    %274 = vmatprep.subr.mxu0 0.0
    %275 = vmatpush2.msra.mxu0 %v99
    %276 = vmatprep.subr.mxu0 0.0
    %277 = vmatpush2.msra.mxu0 %v98
    %278 = vmatprep.subr.mxu0 0.0
    %279 = vmatpush2.msra.mxu0 %v97
    %280 = vmatprep.subr.mxu0 0.0
    %281 = vmatpush2.msra.mxu0 %v96
    %282 = vmatprep.subr.mxu0 0.0
    %283 = vmatpush2.msra.mxu0 %v95
    %284 = vmatprep.mubr.f32.mxu0 %v44
    %285 = vmatmul.mubr.f32.gmra.mxu0 %v43
    %v286 = vpop.f32.mrf.mxu0
    %v287 = vadd.f32 %v217, %v286
    %v288 = vpop.f32.mrf.mxu0
    %289 = vdwg.mxu0
    %290 = vmatprep.subr.mxu0 0.0
    %291 = vmatpush1.msra.mxu0 %v126
    %292 = vmatprep.subr.mxu0 0.0
    %293 = vmatpush1.msra.mxu0 %v125
    %294 = vmatprep.subr.mxu0 0.0
    %295 = vmatpush1.msra.mxu0 %v124
    %296 = vmatprep.subr.mxu0 0.0
    %297 = vmatpush1.msra.mxu0 %v123
    %298 = vmatprep.subr.mxu0 0.0
    %299 = vmatpush1.msra.mxu0 %v122
    %300 = vmatprep.subr.mxu0 0.0
    %301 = vmatpush1.msra.mxu0 %v121
    %302 = vmatprep.subr.mxu0 0.0
    %303 = vmatpush1.msra.mxu0 %v120
    %304 = vmatprep.subr.mxu0 0.0
    %305 = vmatpush1.msra.mxu0 %v119
    %306 = vmatprep.subr.mxu0 0.0
    %307 = vmatpush1.msra.mxu0 %v118
    %308 = vmatprep.subr.mxu0 0.0
    %309 = vmatpush1.msra.mxu0 %v117
    %310 = vmatprep.subr.mxu0 0.0
    %311 = vmatpush1.msra.mxu0 %v116
    %312 = vmatprep.subr.mxu0 0.0
    %313 = vmatpush1.msra.mxu0 %v115
    %314 = vmatprep.subr.mxu0 0.0
    %315 = vmatpush1.msra.mxu0 %v114
    %316 = vmatprep.subr.mxu0 0.0
    %317 = vmatpush1.msra.mxu0 %v113
    %318 = vmatprep.subr.mxu0 0.0
    %319 = vmatpush1.msra.mxu0 %v112
    %320 = vmatprep.subr.mxu0 0.0
    %321 = vmatpush1.msra.mxu0 %v111
    %322 = vmatprep.subr.mxu0 0.0
    %323 = vmatpush2.msra.mxu0 %v142
    %324 = vmatprep.subr.mxu0 0.0
    %325 = vmatpush2.msra.mxu0 %v141
    %326 = vmatprep.subr.mxu0 0.0
    %327 = vmatpush2.msra.mxu0 %v140
    %328 = vmatprep.subr.mxu0 0.0
    %329 = vmatpush2.msra.mxu0 %v139
    %330 = vmatprep.subr.mxu0 0.0
    %331 = vmatpush2.msra.mxu0 %v138
    %332 = vmatprep.subr.mxu0 0.0
    %333 = vmatpush2.msra.mxu0 %v137
    %334 = vmatprep.subr.mxu0 0.0
    %335 = vmatpush2.msra.mxu0 %v136
    %336 = vmatprep.subr.mxu0 0.0
    %337 = vmatpush2.msra.mxu0 %v135
    %338 = vmatprep.subr.mxu0 0.0
    %339 = vmatpush2.msra.mxu0 %v134
    %340 = vmatprep.subr.mxu0 0.0
    %341 = vmatpush2.msra.mxu0 %v133
    %342 = vmatprep.subr.mxu0 0.0
    %343 = vmatpush2.msra.mxu0 %v132
    %344 = vmatprep.subr.mxu0 0.0
    %345 = vmatpush2.msra.mxu0 %v131
    %346 = vmatprep.subr.mxu0 0.0
    %347 = vmatpush2.msra.mxu0 %v130
    %348 = vmatprep.subr.mxu0 0.0
    %349 = vmatpush2.msra.mxu0 %v129
    %350 = vmatprep.subr.mxu0 0.0
    %351 = vmatpush2.msra.mxu0 %v128
    %352 = vmatprep.subr.mxu0 0.0
    %353 = vmatpush2.msra.mxu0 %v127
    %354 = vmatprep.mubr.f32.mxu0 %v46
    %355 = vmatmul.mubr.f32.gmra.mxu0 %v45
    %v356 = vpop.f32.mrf.mxu0
    %v357 = vadd.f32 %v287, %v356
    %v358 = vpop.f32.mrf.mxu0
    %359 = vdwg.mxu0
    %360 = vst [vmem:[#allocation7] sm:$0xff] %v357
    // Predicated region
    $region22: #{tpu_custom_call.1} parent=1 // pred_check
      _
    $region23: #{tpu_custom_call.1} parent=1 // pred_check_branch
      %362 = sbr.rel (0) target = $region25
    $region24: #{tpu_custom_call.1} parent=1 // pred_region
      %s364 = ssub.s32 128, 128
      %365 = vsyncadd [#allocation4], %s364
      %s367 = sshll.u32 [#allocation7], 4
      %s368 = int_to_ptr.vmem [resolvable:$true] %s367
      %370 = dma.vmem_to_hbm [thread:$0]  %s368, 128, %s3, [#allocation4]
    $region25: #{tpu_custom_call.1} parent=1 // pred_fallthru
      _
    // Predicated region
    $region26: #{tpu_custom_call.1} parent=1 // pred_check
      _
    $region27: #{tpu_custom_call.1} parent=1 // pred_check_branch
      %372 = sbr.rel (0) target = $region29
    $region28: #{tpu_custom_call.1} parent=1 // pred_region
      %373 = dma.done [#allocation4], 128
    $region29: #{tpu_custom_call.1} parent=1 // pred_fallthru
      _
    %374 = vsyncpa [#allocation3], 1
    %375 = vsyncpa [#allocation6], 1
    %376 = vsyncpa [#allocation4], 1

</llo_original>
